<compile_context>
chip_gen: v7x
topology: tpu7x:2x2x1
jax: 0.10.0
libtpu: 0.0.40
codegen_flags: <defaults>
</compile_context>

<pallas_src>
import math

import jax
import jax.numpy as jnp
from jax import lax
from jax.experimental import pallas as pl
from jax.experimental.pallas import tpu as pltpu


def _prep_lhs_kernel(x_ref, eq_ref, o_ref):
    """d_norm = l2_norm(x - eq, axis=1), computed once per call."""
    # Dropout(p=0.5, inplace=True) is identity at inference.
    # TODO(synk): training-mode dropout (random mask + 1/(1-p) scale) not implemented.
    d = x_ref[...] - eq_ref[...]
    # No epsilon, matching the PyTorch reference: an all-zero row yields NaN/Inf.
    inv = lax.rsqrt(jnp.sum(d * d, axis=1, keepdims=True))
    o_ref[...] = d * inv


def _arc_cosine_kernel(dn_ref, w_ref, o_ref):
    """cos = d_norm @ l2_norm(W_tile, axis=1).T for one (B, block_o) output tile.

    Weight-row normalization is fused here (each row of W is touched exactly
    once per forward since the grid only tiles the O axis), and the transposed
    contraction is expressed via dot_general so no transpose is materialized.
    """
    w = w_ref[...]
    inv = lax.rsqrt(jnp.sum(w * w, axis=1, keepdims=True))
    wn = w * inv
    o_ref[...] = lax.dot_general(
        dn_ref[...],
        wn,
        dimension_numbers=(((1,), (1,)), ((), ())),   # contract F with F, W kept (block_o, F)
        preferred_element_type=jnp.float32,
    )


def _pick_block_o(o_pad, f, *, max_tile_bytes=4 << 20):
    """Largest multiple-of-128 divisor of o_pad within a per-tile VMEM budget.

    Prefers a block that makes the grid length even (>= 2) so v7x's two
    TensorCores split the parallel O axis evenly; harmless on v5e/v6e.
    """
    bytes_per_row = 4 * f
    cap_rows = max(128, (max_tile_bytes // bytes_per_row) // 128 * 128)
    candidates = [b for b in range(128, o_pad + 1, 128)
                  if o_pad % b == 0 and b <= cap_rows]
    if not candidates:            # o_pad is a multiple of 128, so 128 always divides it
        candidates = [128]
    even = [b for b in candidates if (o_pad // b) % 2 == 0]
    return max(even) if even else max(candidates)


def arc_classifier(x, eq, weight, *, block_o=None):
    B, F = x.shape
    O, F2 = weight.shape
    assert F == F2 and eq.shape == x.shape

    x = x.astype(jnp.float32)
    eq = eq.astype(jnp.float32)
    weight = weight.astype(jnp.float32)

    # Pad out_features up to a multiple of 128 so every tile is lane-dense and
    # no single block can exceed VMEM; padded columns are sliced off at the end.
    o_pad = ((O + 127) // 128) * 128
    if o_pad != O:
        # Pad with ones so padded rows normalize to finite junk (sliced away).
        weight_p = jnp.pad(weight, ((0, o_pad - O), (0, 0)), constant_values=1.0)
    else:
        weight_p = weight

    if block_o is None:
        block_o = _pick_block_o(o_pad, F)
    assert o_pad % block_o == 0 and block_o % 128 == 0
    grid = (o_pad // block_o,)

    # 1) One-shot LHS prep: d_norm = l2_norm(x - eq). Tiny (B, F) arrays; whole
    #    thing lives in VMEM for a single kernel invocation.
    d_norm = pl.pallas_call(
        _prep_lhs_kernel,
        out_shape=jax.ShapeDtypeStruct((B, F), jnp.float32),
    )(x, eq)

    # 2) Fused weight-normalize + cosine matmul, tiled over out_features only.
    #    VMEM budget: double-buffered weight tile + resident LHS + double-buffered
    #    output tile, plus headroom. Set explicitly so v5e's 16 MiB scoped default
    #    never trips, while staying far under v7x's 64 MiB physical VMEM.
    vmem_bytes = (2 * block_o * F * 4) + (2 * B * F * 4) + (2 * B * block_o * 4) + (2 << 20)
    vmem_bytes = min(max(vmem_bytes, 4 << 20), 48 << 20)

    out_p = pl.pallas_call(
        _arc_cosine_kernel,
        out_shape=jax.ShapeDtypeStruct((B, o_pad), jnp.float32),
        grid=grid,
        in_specs=[
            pl.BlockSpec((B, F), lambda j: (0, 0)),           # resident LHS
            pl.BlockSpec((block_o, F), lambda j: (j, 0)),     # streamed weight tile
        ],
        out_specs=pl.BlockSpec((B, block_o), lambda j: (0, j)),
        compiler_params=pltpu.CompilerParams(
            dimension_semantics=("parallel",),
            vmem_limit_bytes=vmem_bytes,
        ),
    )(d_norm, weight_p)

    return out_p[:, :O] if o_pad != O else out_p


def arc_classifier_ref(x, eq, weight):
    d = x - eq
    d = d / jnp.linalg.norm(d, axis=1, keepdims=True)
    w = weight / jnp.linalg.norm(weight, axis=1, keepdims=True)
    return d @ w.T


if __name__ == "__main__":
    in_features = 128
    out_features = 1000   # deliberately NOT a multiple of 128: exercises pad + slice path
    batch = 8

    key = jax.random.PRNGKey(0)
    kx, keq, kw = jax.random.split(key, 3)

    x = jax.random.normal(kx, (batch, in_features), dtype=jnp.float32)
    eq = jax.random.normal(keq, (batch, in_features), dtype=jnp.float32)

    # ArcMarginProduct.reset_parameters: uniform(-stdv, stdv), stdv = 1/sqrt(in_features)
    stdv = 1.0 / math.sqrt(in_features)
    weight = jax.random.uniform(
        kw, (out_features, in_features), dtype=jnp.float32,
        minval=-stdv, maxval=stdv,
    )

    out = arc_classifier(x, eq, weight)
    out = jax.block_until_ready(out)

    ref = arc_classifier_ref(x, eq, weight)
    assert out.shape == (batch, out_features)
    assert jnp.allclose(out, ref, atol=2e-5, rtol=2e-5), "mismatch vs reference"

    print("KERNEL_OK")
</pallas_src>

<mosaic_0001>
module attributes {stable_mosaic.version = 11 : i64} {
  func.func @_prep_lhs_kernel(%arg0: memref<8x128xf32, #tpu.memory_space<vmem>>, %arg1: memref<8x128xf32, #tpu.memory_space<vmem>>, %arg2: memref<8x128xf32, #tpu.memory_space<vmem>>) attributes {dimension_semantics = [], scalar_prefetch = 0 : i64, scratch_operands = 0 : i64, tpu.core_type = #tpu.core_type<tc>} {
    %c0 = arith.constant 0 : index
    %c0_0 = arith.constant 0 : index
    %0 = vector.load %arg0[%c0, %c0_0] : memref<8x128xf32, #tpu.memory_space<vmem>>, vector<8x128xf32>
    %c0_1 = arith.constant 0 : index
    %c0_2 = arith.constant 0 : index
    %1 = vector.load %arg1[%c0_1, %c0_2] : memref<8x128xf32, #tpu.memory_space<vmem>>, vector<8x128xf32>
    %2 = arith.subf %0, %1 : vector<8x128xf32>
    %3 = arith.mulf %2, %2 : vector<8x128xf32>
    %cst = arith.constant dense<0.000000e+00> : vector<8xf32>
    %4 = vector.multi_reduction <add>, %3, %cst [1] : vector<8x128xf32> to vector<8xf32>
    %5 = vector.shape_cast %4 : vector<8xf32> to vector<8x1xf32>
    %6 = math.rsqrt %5 : vector<8x1xf32>
    %7 = vector.broadcast %6 : vector<8x1xf32> to vector<8x128xf32>
    %8 = arith.mulf %2, %7 : vector<8x128xf32>
    %c0_3 = arith.constant 0 : index
    %c0_4 = arith.constant 0 : index
    %9 = vector.load %arg2[%c0_3, %c0_4] : memref<8x128xf32, #tpu.memory_space<vmem>>, vector<8x128xf32>
    tpu.vector_store %arg2[%c0_3, %c0_4], %8 {strides = array<i32>} : memref<8x128xf32, #tpu.memory_space<vmem>>, vector<8x128xf32>,
    return
  }
}

</mosaic_0001>

<llo_original>
// kernel: tpu_custom_call.1
$region0: #{tpu_custom_call.1}
  #allocation0 [shape = 'u32[]', space=smem, size = 0x4, offset = 0x4, fixed_abs, tag = 'smem constant byte address 0x4 - core index']
  #allocation1 [shape = 'u32[144,128]{1,0:T(1,128)}', space=vmem, size = 0x12000, scoped, tag = 'internal scratch']
  %s0 = inlined_call_operand.hbm [shape: f32[8,128], index: 0, kind: input, shape index: {}]
  %s1 = inlined_call_operand.hbm [shape: f32[8,128], index: 1, kind: input, shape index: {}]
  %s2 = inlined_call_operand.hbm [shape: f32[8,128], index: 2, kind: output, shape index: {}]
  %s3 = sld [smem:[#allocation0]]
  $region26: #{tpu_custom_call.1} parent=0
    _
  %s5 = ssub.s32 1, %s3
  %s6 = scalar_select 0, %s5, %s3
  $region1: #{tpu_custom_call.1} parent=0
    #allocation2 [shape = 'u8[4096]{0}', space=vmem, size = 0x1000, scoped, tag = 'input window, operand 0, single buffered']
    #allocation3 [shape = 's32[1]{0}', space=sflag, size = 0x4, scoped, tag = 'scoped memory for tpu_custom_call.1']
    #allocation4 [shape = 's32[1]{0}', space=sflag, size = 0x4, scoped, tag = 'scoped memory for tpu_custom_call.1']
    #allocation5 [shape = 'u8[4096]{0}', space=vmem, size = 0x1000, scoped, tag = 'input window, operand 1, single buffered']
    #allocation6 [shape = 's32[1]{0}', space=sflag, size = 0x4, scoped, tag = 'scoped memory for tpu_custom_call.1']
    #allocation7 [shape = 'u8[4096]{0}', space=vmem, size = 0x1000, scoped, tag = 'output window, operand 0, single buffered']
    %7 = vsyncpa [#allocation3], 0
    %8 = vsyncpa [#allocation6], 0
    %9 = vsyncpa [#allocation4], 0
    // Predicated region
    $region2: #{tpu_custom_call.1} parent=1 // pred_check
      _
    $region3: #{tpu_custom_call.1} parent=1 // pred_check_branch
      %11 = sbr.rel (0) target = $region5
    $region4: #{tpu_custom_call.1} parent=1 // pred_region
      %s13 = ssub.s32 128, 128
      %14 = vsyncadd [#allocation3], %s13
      %s16 = sshll.u32 [#allocation2], 4
      %s17 = int_to_ptr.vmem [resolvable:$true] %s16
      %19 = dma.hbm_to_vmem [thread:$0]  %s0, 128, %s17, [#allocation3]
    $region5: #{tpu_custom_call.1} parent=1 // pred_fallthru
      _
    // Predicated region
    $region6: #{tpu_custom_call.1} parent=1 // pred_check
      _
    $region7: #{tpu_custom_call.1} parent=1 // pred_check_branch
      %21 = sbr.rel (0) target = $region9
    $region8: #{tpu_custom_call.1} parent=1 // pred_region
      %s23 = ssub.s32 128, 128
      %24 = vsyncadd [#allocation6], %s23
      %s26 = sshll.u32 [#allocation5], 4
      %s27 = int_to_ptr.vmem [resolvable:$true] %s26
      %29 = dma.hbm_to_vmem [thread:$0]  %s1, 128, %s27, [#allocation6]
    $region9: #{tpu_custom_call.1} parent=1 // pred_fallthru
      _
    // Predicated region
    $region10: #{tpu_custom_call.1} parent=1 // pred_check
      _
    $region11: #{tpu_custom_call.1} parent=1 // pred_check_branch
      %31 = sbr.rel (0) target = $region13
    $region12: #{tpu_custom_call.1} parent=1 // pred_region
      %32 = dma.done [#allocation3], 128
    $region13: #{tpu_custom_call.1} parent=1 // pred_fallthru
      _
    // Predicated region
    $region14: #{tpu_custom_call.1} parent=1 // pred_check
      _
    $region15: #{tpu_custom_call.1} parent=1 // pred_check_branch
      %34 = sbr.rel (0) target = $region17
    $region16: #{tpu_custom_call.1} parent=1 // pred_region
      %35 = dma.done [#allocation6], 128
    $region17: #{tpu_custom_call.1} parent=1 // pred_fallthru
      _
    %v36 = vld [vmem:[#allocation2] sm:$0xff]
    %v37 = vld [vmem:[#allocation5] sm:$0xff]
    %v38 = vsub.f32 %v36, %v37
    %v39 = vmul.f32 %v38, %v38
    %40 = vadd.xlane.f32.xlu0 %v39
    %v41 = vpop.xlane.xlu0 %40
    %v42 = vrsqrt.pop %v41
    %v43 = vmul.f32 %v38, %v42
    %44 = vst [vmem:[#allocation7] sm:$0xff] %v43
    // Predicated region
    $region18: #{tpu_custom_call.1} parent=1 // pred_check
      _
    $region19: #{tpu_custom_call.1} parent=1 // pred_check_branch
      %46 = sbr.rel (0) target = $region21
    $region20: #{tpu_custom_call.1} parent=1 // pred_region
      %s48 = ssub.s32 128, 128
      %49 = vsyncadd [#allocation4], %s48
      %s51 = sshll.u32 [#allocation7], 4
      %s52 = int_to_ptr.vmem [resolvable:$true] %s51
      %54 = dma.vmem_to_hbm [thread:$0]  %s52, 128, %s2, [#allocation4]
    $region21: #{tpu_custom_call.1} parent=1 // pred_fallthru
      _
    // Predicated region
    $region22: #{tpu_custom_call.1} parent=1 // pred_check
      _
    $region23: #{tpu_custom_call.1} parent=1 // pred_check_branch
      %56 = sbr.rel (0) target = $region25
    $region24: #{tpu_custom_call.1} parent=1 // pred_region
      %57 = dma.done [#allocation4], 128
    $region25: #{tpu_custom_call.1} parent=1 // pred_fallthru
      _
    %58 = vsyncpa [#allocation3], 1
    %59 = vsyncpa [#allocation6], 1
    %60 = vsyncpa [#allocation4], 1

</llo_original>
